<compile_context>
chip_gen: v6e
topology: v6e:2x2x1
jax: 0.10.0
libtpu: 0.0.40
codegen_flags: <defaults>
</compile_context>

<pallas_src>
import functools

import jax
import jax.numpy as jnp
import numpy as np
from jax import lax
from jax.experimental import pallas as pl
from jax.experimental.pallas import tpu as pltpu

LN_EPS = 1e-5  # torch.nn.LayerNorm default


def _decoder_kernel(nodes_ref, vo_ref, mask_ref, w_ref, vec_ref, out_ref,
                    *, mxu_dtype, precision):
    """One (batch_block, layer) grid step of the fused AIGAlignDecoder."""
    layer = pl.program_id(1)

    # Seed the resident activation (out_ref stays in VMEM across the layer axis
    # because its block index does not depend on `layer`).
    @pl.when(layer == 0)
    def _():
        out_ref[...] = nodes_ref[...]

    x = out_ref[...]                      # (Gb, N, H) float32, resident across layers
    gb, n, h = x.shape

    vec = vec_ref[0]                      # (5, H): [bo, b_fc1, b_fc2, ln_g, ln_b] (tiny)
    mask = mask_ref[...].reshape(gb, n)   # (Gb, N), lane dim = N
    vo = vo_ref[0]                        # (Gb, 1, H): linear_out(linear_v(ver)) pre-folded

    # ---- collapsed cross-attention branch (kv length == 1; exact identity) ----
    # attn[b, n, :] = mask[b, n] * vo[b, :] + bo ; masked rows get the bias only.
    # Flatten to a lane-dense (Gb*N, H) view for the LN + MLP body (N % 8 == 0 or
    # N == full keeps this reshape layout-free).
    x1 = (x + vec[0] + mask[..., None] * vo).reshape(gb * n, h)

    # ---- mlp_norm: single-pass statistics (independent XLU reductions) ----
    inv_h = 1.0 / h
    s1 = jnp.sum(x1, axis=-1, keepdims=True)
    s2 = jnp.sum(x1 * x1, axis=-1, keepdims=True)
    mu = s1 * inv_h
    var = s2 * inv_h - mu * mu
    g = (x1 - mu) * lax.rsqrt(var + LN_EPS) * vec[3] + vec[4]

    def mm(a, w):                         # MXU matmul, f32 accumulation
        return jnp.dot(a.astype(mxu_dtype), w.astype(mxu_dtype),
                       precision=precision, preferred_element_type=jnp.float32)

    # ---- AIGMLP (Dropout identity in eval); per-use weight loads ----
    u = jnp.maximum(mm(g, w_ref[0, 0]) + vec[1], 0.0)    # fc1 + ReLU
    y = mm(u, w_ref[0, 1]) + vec[2]                       # fc2

    out_ref[...] = (x1 + y).reshape(gb, n, h)             # residual 2; stays resident


def _default_vmem_limit():
    """Per-generation scoped-VMEM budget: ~48 MiB on v7x (64 MiB physical),
    ~112 MiB on v5e/v6e (128 MiB physical); conservative fallback otherwise."""
    cap = None
    try:
        cap = getattr(pltpu.get_tpu_info(), "vmem_capacity_bytes", None)
    except Exception:
        cap = None
    if not cap:
        return 48 * 1024 * 1024
    return int(max(32 * 1024 * 1024, min(cap - 16 * 1024 * 1024, 112 * 1024 * 1024)))


def aig_align_decoder(input_nodes, input_verilogs, padding_mask, layer_params,
                      *, num_heads, batch_block=None, mxu_dtype=jnp.float32,
                      precision=None, vmem_limit_bytes=None):
    """Fused Pallas implementation of AIGAlignDecoder.forward (all layers, one call)."""
    B, N, H = input_nodes.shape
    # The collapsed attention is exact only because the key/value length is 1.
    assert input_verilogs.ndim == 2 and input_verilogs.shape[0] == B, \
        "AIGCrossAttention kv_len must be 1 (one pooled embedding per sample)"
    Hc = input_verilogs.shape[-1]
    L = len(layer_params)
    assert H % num_heads == 0            # heads only shape the (cancelling) score path
    Gb = B if batch_block is None else batch_block
    assert B % Gb == 0

    nodes = input_nodes.astype(jnp.float32)
    ver = input_verilogs.astype(jnp.float32)
    if padding_mask is None:
        mask3 = jnp.ones((B, 1, N), jnp.float32)
    else:
        mask3 = (padding_mask.reshape(B, 1, N) > 0).astype(jnp.float32)

    # ---- host-side weight folding: linear_out ∘ linear_v (exact) --------------------
    # vo[l, b, :] = (ver[b] @ Wv[l] + bv[l]) @ Wo[l]; one-time tiny compute, kept at
    # HIGHEST precision so the folding introduces no extra error.
    w_v = jnp.stack([p["Wv"] for p in layer_params])                  # (L, Hc, H)
    b_v = jnp.stack([p["bv"] for p in layer_params])                  # (L, H)
    w_o = jnp.stack([p["Wo"] for p in layer_params])                  # (L, H, H)
    hp = jax.lax.Precision.HIGHEST
    v_all = jnp.einsum("bc,lch->lbh", ver, w_v, precision=hp) + b_v[:, None, :]
    vo = jnp.einsum("lbh,lhd->lbd", v_all, w_o, precision=hp)         # (L, B, H)
    vo = vo.reshape(L, B, 1, H).astype(jnp.float32)                   # keep kv axis for bcast

    # Only the two MLP (H,H) slabs reach the kernel; bf16-in-HBM when requested.
    w_hh = jnp.stack([jnp.stack([p["W1"], p["W2"]]) for p in layer_params])  # (L, 2, H, H)
    if mxu_dtype != jnp.float32:
        w_hh = w_hh.astype(mxu_dtype)
    vecs = jnp.stack([jnp.stack([p["bo"], p["b1"], p["b2"],
                                 p["mlp_ln_g"], p["mlp_ln_b"]])
                      for p in layer_params]).astype(jnp.float32)            # (L, 5, H)

    kernel = functools.partial(_decoder_kernel, mxu_dtype=mxu_dtype, precision=precision)
    vmem_limit = _default_vmem_limit() if vmem_limit_bytes is None else vmem_limit_bytes

    return pl.pallas_call(
        kernel,
        out_shape=jax.ShapeDtypeStruct((B, N, H), jnp.float32),
        grid=(B // Gb, L),                              # layers innermost (sequential dep)
        in_specs=[
            pl.BlockSpec((Gb, N, H), lambda b, l: (b, 0, 0)),        # nodes (read at l==0)
            pl.BlockSpec((1, Gb, 1, H), lambda b, l: (l, b, 0, 0)),  # folded attn term
            pl.BlockSpec((Gb, 1, N), lambda b, l: (b, 0, 0)),        # padding mask, lane=N
            pl.BlockSpec((1, 2, H, H), lambda b, l: (l, 0, 0, 0)),   # [fc1, fc2] weights
            pl.BlockSpec((1, 5, H), lambda b, l: (l, 0, 0)),         # biases + ln affine
        ],
        out_specs=pl.BlockSpec((Gb, N, H), lambda b, l: (b, 0, 0)),  # resident accumulator
        compiler_params=pltpu.CompilerParams(
            dimension_semantics=("parallel", "arbitrary"),
            vmem_limit_bytes=vmem_limit),
    )(nodes, vo, mask3, w_hh, vecs)


# ---------------- deterministic parameter init & full-math float64 reference ----------------

def init_block_params(key, H, Hc):
    """Weights stored as (in_features, out_features), i.e. already transposed vs nn.Linear."""
    ks = jax.random.split(key, 16)

    def lin(kw, kb, fan_in, fan_out):
        bound = 1.0 / np.sqrt(fan_in)
        W = jax.random.uniform(kw, (fan_in, fan_out), jnp.float32, -bound, bound)
        b = jax.random.uniform(kb, (fan_out,), jnp.float32, -bound, bound)
        return W, b

    Wq, bq = lin(ks[0], ks[1], H, H)       # linear_q   (cancels out of the forward)
    Wk, bk = lin(ks[2], ks[3], Hc, H)      # linear_k   (cancels out of the forward)
    Wv, bv = lin(ks[4], ks[5], Hc, H)      # linear_v
    Wo, bo = lin(ks[6], ks[7], H, H)       # linear_out
    W1, b1 = lin(ks[8], ks[9], H, H)       # AIGMLP fc1
    W2, b2 = lin(ks[10], ks[11], H, H)     # AIGMLP fc2
    return {
        "attn_ln_g": 1.0 + 0.1 * jax.random.normal(ks[12], (H,), jnp.float32),
        "attn_ln_b": 0.05 * jax.random.normal(ks[13], (H,), jnp.float32),
        "Wq": Wq, "bq": bq, "Wk": Wk, "bk": bk, "Wv": Wv, "bv": bv, "Wo": Wo, "bo": bo,
        "mlp_ln_g": 1.0 + 0.1 * jax.random.normal(ks[14], (H,), jnp.float32),
        "mlp_ln_b": 0.05 * jax.random.normal(ks[15], (H,), jnp.float32),
        "W1": W1, "b1": b1, "W2": W2, "b2": b2,
    }


def ref_decoder_np(nodes, ver, mask, layer_params, *, num_heads):
    """Float64 numpy reference implementing the full PyTorch math (q/k/heads/softmax)."""
    x = np.asarray(nodes, np.float64)
    ver = np.asarray(ver, np.float64)
    mask = None if mask is None else np.asarray(mask, np.float64)
    B, N, H = x.shape
    hd = H // num_heads
    NEG = float(np.finfo(np.float32).min)

    def ln(v, g, b):
        mu = v.mean(-1, keepdims=True)
        var = ((v - mu) ** 2).mean(-1, keepdims=True)
        return (v - mu) / np.sqrt(var + LN_EPS) * g + b

    for p in layer_params:
        pn = {kk: np.asarray(vv, np.float64) for kk, vv in p.items()}
        # --- attn_norm + AIGCrossAttention (key/value sequence length = 1) ---
        hn = ln(x, pn["attn_ln_g"], pn["attn_ln_b"])
        q = hn @ pn["Wq"] + pn["bq"]                                     # (B, N, H)
        k = ver @ pn["Wk"] + pn["bk"]                                    # (B, H)
        v = ver @ pn["Wv"] + pn["bv"]                                    # (B, H)
        qh = q.reshape(B, N, num_heads, hd).transpose(0, 2, 1, 3)        # (B, nh, N, hd)
        kh = k.reshape(B, 1, num_heads, hd).transpose(0, 2, 1, 3)        # (B, nh, 1, hd)
        vh = v.reshape(B, 1, num_heads, hd).transpose(0, 2, 1, 3)        # (B, nh, 1, hd)
        scores = np.einsum("bhnd,bhkd->bhnk", qh, kh) / np.sqrt(hd)      # (B, nh, N, 1)
        if mask is not None:
            valid = mask[:, None, :, None] > 0
            scores = np.where(valid, scores, NEG)
        w = np.exp(scores - scores.max(-1, keepdims=True))
        w = w / w.sum(-1, keepdims=True)
        if mask is not None:
            w = np.where(valid, w, 0.0)   # fully-masked rows -> 0 (PyTorch would give NaN)
        a = np.einsum("bhnk,bhkd->bhnd", w, vh)
        a = a.transpose(0, 2, 1, 3).reshape(B, N, H) @ pn["Wo"] + pn["bo"]
        x1 = a + x
        # --- mlp_norm + AIGMLP (dropout identity in eval) ---
        g = ln(x1, pn["mlp_ln_g"], pn["mlp_ln_b"])
        u = np.maximum(g @ pn["W1"] + pn["b1"], 0.0)
        x = x1 + u @ pn["W2"] + pn["b2"]
    return x


if __name__ == "__main__":
    B, N, H, HC = 4, 16, 32, 48          # batch, nodes, hidden_size, cross_hidden_size
    NUM_HEADS = 4                        # cross_num_heads
    NUM_LAYERS = 3                       # num_cross_decoder_layers

    key = jax.random.PRNGKey(0)
    k_nodes, k_ver, k_rest = jax.random.split(key, 3)
    input_nodes = jax.random.normal(k_nodes, (B, N, H), jnp.float32)
    input_verilogs = jax.random.normal(k_ver, (B, HC), jnp.float32)
    padding_mask = jnp.ones((B, N), jnp.float32)
    padding_mask = padding_mask.at[1, N - 3:].set(0.0).at[3, N - 5:].set(0.0)

    params = [init_block_params(k, H, HC) for k in jax.random.split(k_rest, NUM_LAYERS)]
    ref = ref_decoder_np(input_nodes, input_verilogs, padding_mask, params,
                         num_heads=NUM_HEADS)

    # 1) As-shipped perf config: Gb = B, f32 operands, default (fast) MXU precision.
    #    Loose tolerance because default precision may use single-pass bf16 operands.
    out = jax.block_until_ready(
        aig_align_decoder(input_nodes, input_verilogs, padding_mask, params,
                          num_heads=NUM_HEADS))
    np.testing.assert_allclose(np.asarray(out, np.float64), ref, rtol=1e-1, atol=1e-1)

    # 2) Tight numeric check of the collapsed-attention identity, host-side Wo folding
    #    and multi-batch-block out_ref residency (explicit HIGHEST in-kernel precision).
    out_hi = jax.block_until_ready(
        aig_align_decoder(input_nodes, input_verilogs, padding_mask, params,
                          num_heads=NUM_HEADS, batch_block=2,
                          precision=jax.lax.Precision.HIGHEST))
    np.testing.assert_allclose(np.asarray(out_hi, np.float64), ref, rtol=1e-4, atol=1e-4)

    # 3) bf16 MXU operands with bf16 weights stored in HBM (v6e/v7x path); f32 accumulation.
    out_bf16 = jax.block_until_ready(
        aig_align_decoder(input_nodes, input_verilogs, padding_mask, params,
                          num_heads=NUM_HEADS, batch_block=2, mxu_dtype=jnp.bfloat16))
    np.testing.assert_allclose(np.asarray(out_bf16, np.float64), ref,
                               rtol=1.5e-1, atol=1.5e-1)

    print("KERNEL_OK")
</pallas_src>

<mosaic_0001>
module attributes {stable_mosaic.version = 11 : i64} {
  func.func @_decoder_kernel(%arg0: i32, %arg1: i32, %arg2: memref<4x16x32xf32, #tpu.memory_space<vmem>>, %arg3: memref<1x4x1x32xf32, #tpu.memory_space<vmem>>, %arg4: memref<4x1x16xf32, #tpu.memory_space<vmem>>, %arg5: memref<1x2x32x32xf32, #tpu.memory_space<vmem>>, %arg6: memref<1x5x32xf32, #tpu.memory_space<vmem>>, %arg7: memref<4x16x32xf32, #tpu.memory_space<vmem>>) attributes {dimension_semantics = [#tpu.dimension_semantics<parallel>, #tpu.dimension_semantics<arbitrary>], iteration_bounds = array<i64: 1, 3>, scalar_prefetch = 0 : i64, scratch_operands = 0 : i64, tpu.core_type = #tpu.core_type<tc>, window_params = [{transform_indices = @transform_0, window_bounds = array<i64: 4, 16, 32>}, {transform_indices = @transform_1, window_bounds = array<i64: 1, 4, 1, 32>}, {transform_indices = @transform_2, window_bounds = array<i64: 4, 1, 16>}, {transform_indices = @transform_3, window_bounds = array<i64: 1, 2, 32, 32>}, {transform_indices = @transform_4, window_bounds = array<i64: 1, 5, 32>}, {transform_indices = @transform_5, window_bounds = array<i64: 4, 16, 32>}]} {
    %c0_i32 = arith.constant 0 : i32
    %0 = arith.cmpi eq, %arg1, %c0_i32 : i32
    %1 = arith.extui %0 : i1 to i32
    %c0_i32_0 = arith.constant 0 : i32
    %2 = arith.cmpi ne, %1, %c0_i32_0 : i32
    scf.if %2 {
      %c0_30 = arith.constant 0 : index
      %c0_31 = arith.constant 0 : index
      %c0_32 = arith.constant 0 : index
      %70 = vector.load %arg2[%c0_30, %c0_31, %c0_32] : memref<4x16x32xf32, #tpu.memory_space<vmem>>, vector<4x16x32xf32>
      %c0_33 = arith.constant 0 : index
      %c0_34 = arith.constant 0 : index
      %c0_35 = arith.constant 0 : index
      %71 = vector.load %arg7[%c0_33, %c0_34, %c0_35] : memref<4x16x32xf32, #tpu.memory_space<vmem>>, vector<4x16x32xf32>
      tpu.vector_store %arg7[%c0_33, %c0_34, %c0_35], %70 {strides = array<i32>} : memref<4x16x32xf32, #tpu.memory_space<vmem>>, vector<4x16x32xf32>,
    } else {
    }
    %c0 = arith.constant 0 : index
    %c0_1 = arith.constant 0 : index
    %c0_2 = arith.constant 0 : index
    %3 = vector.load %arg7[%c0, %c0_1, %c0_2] : memref<4x16x32xf32, #tpu.memory_space<vmem>>, vector<4x16x32xf32>
    %c0_3 = arith.constant 0 : index
    %c0_4 = arith.constant 0 : index
    %c0_5 = arith.constant 0 : index
    %4 = vector.load %arg6[%c0_3, %c0_4, %c0_5] : memref<1x5x32xf32, #tpu.memory_space<vmem>>, vector<1x5x32xf32>
    %5 = vector.shape_cast %4 : vector<1x5x32xf32> to vector<5x32xf32>
    %c0_6 = arith.constant 0 : index
    %c0_7 = arith.constant 0 : index
    %c0_8 = arith.constant 0 : index
    %6 = vector.load %arg4[%c0_6, %c0_7, %c0_8] : memref<4x1x16xf32, #tpu.memory_space<vmem>>, vector<4x1x16xf32>
    %7 = vector.shape_cast %6 : vector<4x1x16xf32> to vector<4x16xf32>
    %c0_9 = arith.constant 0 : index
    %c0_10 = arith.constant 0 : index
    %c0_11 = arith.constant 0 : index
    %c0_12 = arith.constant 0 : index
    %8 = vector.load %arg3[%c0_9, %c0_10, %c0_11, %c0_12] : memref<1x4x1x32xf32, #tpu.memory_space<vmem>>, vector<1x4x1x32xf32>
    %9 = vector.shape_cast %8 : vector<1x4x1x32xf32> to vector<4x1x32xf32>
    %10 = vector.extract_strided_slice %5 {offsets = [0, 0], sizes = [1, 32], strides = [1, 1]} : vector<5x32xf32> to vector<1x32xf32>
    %11 = vector.shape_cast %10 : vector<1x32xf32> to vector<32xf32>
    %12 = vector.shape_cast %11 : vector<32xf32> to vector<1x1x32xf32>
    %13 = vector.broadcast %12 : vector<1x1x32xf32> to vector<4x16x32xf32>
    %14 = arith.addf %3, %13 : vector<4x16x32xf32>
    %15 = vector.shape_cast %7 : vector<4x16xf32> to vector<4x16x1xf32>
    %16 = vector.broadcast %15 : vector<4x16x1xf32> to vector<4x16x32xf32>
    %17 = vector.broadcast %9 : vector<4x1x32xf32> to vector<4x16x32xf32>
    %18 = arith.mulf %16, %17 : vector<4x16x32xf32>
    %19 = arith.addf %14, %18 : vector<4x16x32xf32>
    %20 = vector.shape_cast %19 : vector<4x16x32xf32> to vector<64x32xf32>
    %cst = arith.constant dense<0.000000e+00> : vector<64xf32>
    %21 = vector.multi_reduction <add>, %20, %cst [1] : vector<64x32xf32> to vector<64xf32>
    %22 = vector.shape_cast %21 : vector<64xf32> to vector<64x1xf32>
    %23 = arith.mulf %20, %20 : vector<64x32xf32>
    %cst_13 = arith.constant dense<0.000000e+00> : vector<64xf32>
    %24 = vector.multi_reduction <add>, %23, %cst_13 [1] : vector<64x32xf32> to vector<64xf32>
    %25 = vector.shape_cast %24 : vector<64xf32> to vector<64x1xf32>
    %cst_14 = arith.constant 3.125000e-02 : f32
    %26 = vector.broadcast %cst_14 : f32 to vector<64x1xf32>
    %27 = arith.mulf %22, %26 : vector<64x1xf32>
    %cst_15 = arith.constant 3.125000e-02 : f32
    %28 = vector.broadcast %cst_15 : f32 to vector<64x1xf32>
    %29 = arith.mulf %25, %28 : vector<64x1xf32>
    %30 = arith.mulf %27, %27 : vector<64x1xf32>
    %31 = arith.subf %29, %30 : vector<64x1xf32>
    %32 = vector.broadcast %27 : vector<64x1xf32> to vector<64x32xf32>
    %33 = arith.subf %20, %32 : vector<64x32xf32>
    %cst_16 = arith.constant 9.99999974E-6 : f32
    %34 = vector.broadcast %cst_16 : f32 to vector<64x1xf32>
    %35 = arith.addf %31, %34 : vector<64x1xf32>
    %36 = math.rsqrt %35 : vector<64x1xf32>
    %37 = vector.broadcast %36 : vector<64x1xf32> to vector<64x32xf32>
    %38 = arith.mulf %33, %37 : vector<64x32xf32>
    %39 = vector.extract_strided_slice %5 {offsets = [3, 0], sizes = [1, 32], strides = [1, 1]} : vector<5x32xf32> to vector<1x32xf32>
    %40 = vector.shape_cast %39 : vector<1x32xf32> to vector<32xf32>
    %41 = vector.shape_cast %40 : vector<32xf32> to vector<1x32xf32>
    %42 = vector.broadcast %41 : vector<1x32xf32> to vector<64x32xf32>
    %43 = arith.mulf %38, %42 : vector<64x32xf32>
    %44 = vector.extract_strided_slice %5 {offsets = [4, 0], sizes = [1, 32], strides = [1, 1]} : vector<5x32xf32> to vector<1x32xf32>
    %45 = vector.shape_cast %44 : vector<1x32xf32> to vector<32xf32>
    %46 = vector.shape_cast %45 : vector<32xf32> to vector<1x32xf32>
    %47 = vector.broadcast %46 : vector<1x32xf32> to vector<64x32xf32>
    %48 = arith.addf %43, %47 : vector<64x32xf32>
    %c0_17 = arith.constant 0 : index
    %c0_18 = arith.constant 0 : index
    %c0_19 = arith.constant 0 : index
    %c0_20 = arith.constant 0 : index
    %49 = vector.load %arg5[%c0_17, %c0_18, %c0_19, %c0_20] : memref<1x2x32x32xf32, #tpu.memory_space<vmem>>, vector<1x1x32x32xf32>
    %50 = vector.shape_cast %49 : vector<1x1x32x32xf32> to vector<32x32xf32>
    %cst_21 = arith.constant dense<0.000000e+00> : vector<64x32xf32>
    %51 = tpu.matmul %48, %50, %cst_21 {dimension_numbers = #tpu.dot_dimension_numbers<[1], [0], [0], [1], [0, 0, 1, 1], [], []>} : vector<64x32xf32>, vector<32x32xf32>, vector<64x32xf32> -> vector<64x32xf32>
    %52 = vector.extract_strided_slice %5 {offsets = [1, 0], sizes = [1, 32], strides = [1, 1]} : vector<5x32xf32> to vector<1x32xf32>
    %53 = vector.shape_cast %52 : vector<1x32xf32> to vector<32xf32>
    %54 = vector.shape_cast %53 : vector<32xf32> to vector<1x32xf32>
    %55 = vector.broadcast %54 : vector<1x32xf32> to vector<64x32xf32>
    %56 = arith.addf %51, %55 : vector<64x32xf32>
    %cst_22 = arith.constant 0.000000e+00 : f32
    %57 = vector.broadcast %cst_22 : f32 to vector<64x32xf32>
    %58 = arith.maximumf %56, %57 : vector<64x32xf32>
    %c0_23 = arith.constant 0 : index
    %c1 = arith.constant 1 : index
    %c0_24 = arith.constant 0 : index
    %c0_25 = arith.constant 0 : index
    %59 = vector.load %arg5[%c0_23, %c1, %c0_24, %c0_25] : memref<1x2x32x32xf32, #tpu.memory_space<vmem>>, vector<1x1x32x32xf32>
    %60 = vector.shape_cast %59 : vector<1x1x32x32xf32> to vector<32x32xf32>
    %cst_26 = arith.constant dense<0.000000e+00> : vector<64x32xf32>
    %61 = tpu.matmul %58, %60, %cst_26 {dimension_numbers = #tpu.dot_dimension_numbers<[1], [0], [0], [1], [0, 0, 1, 1], [], []>} : vector<64x32xf32>, vector<32x32xf32>, vector<64x32xf32> -> vector<64x32xf32>
    %62 = vector.extract_strided_slice %5 {offsets = [2, 0], sizes = [1, 32], strides = [1, 1]} : vector<5x32xf32> to vector<1x32xf32>
    %63 = vector.shape_cast %62 : vector<1x32xf32> to vector<32xf32>
    %64 = vector.shape_cast %63 : vector<32xf32> to vector<1x32xf32>
    %65 = vector.broadcast %64 : vector<1x32xf32> to vector<64x32xf32>
    %66 = arith.addf %61, %65 : vector<64x32xf32>
    %67 = arith.addf %20, %66 : vector<64x32xf32>
    %68 = vector.shape_cast %67 : vector<64x32xf32> to vector<4x16x32xf32>
    %c0_27 = arith.constant 0 : index
    %c0_28 = arith.constant 0 : index
    %c0_29 = arith.constant 0 : index
    %69 = vector.load %arg7[%c0_27, %c0_28, %c0_29] : memref<4x16x32xf32, #tpu.memory_space<vmem>>, vector<4x16x32xf32>
    tpu.vector_store %arg7[%c0_27, %c0_28, %c0_29], %68 {strides = array<i32>} : memref<4x16x32xf32, #tpu.memory_space<vmem>>, vector<4x16x32xf32>,
    return
  }
  func.func @transform_0(%arg0: i32, %arg1: i32) -> (i32, i32, i32) {
    %c0_i32 = arith.constant 0 : i32
    %c0_i32_0 = arith.constant 0 : i32
    %c0_i32_1 = arith.constant 0 : i32
    return %arg0, %c0_i32, %c0_i32_0 : i32, i32, i32
  }
  func.func @transform_1(%arg0: i32, %arg1: i32) -> (i32, i32, i32, i32) {
    %c0_i32 = arith.constant 0 : i32
    %c0_i32_0 = arith.constant 0 : i32
    %c0_i32_1 = arith.constant 0 : i32
    return %arg1, %arg0, %c0_i32, %c0_i32_0 : i32, i32, i32, i32
  }
  func.func @transform_2(%arg0: i32, %arg1: i32) -> (i32, i32, i32) {
    %c0_i32 = arith.constant 0 : i32
    %c0_i32_0 = arith.constant 0 : i32
    %c0_i32_1 = arith.constant 0 : i32
    return %arg0, %c0_i32, %c0_i32_0 : i32, i32, i32
  }
  func.func @transform_3(%arg0: i32, %arg1: i32) -> (i32, i32, i32, i32) {
    %c0_i32 = arith.constant 0 : i32
    %c0_i32_0 = arith.constant 0 : i32
    %c0_i32_1 = arith.constant 0 : i32
    %c0_i32_2 = arith.constant 0 : i32
    return %arg1, %c0_i32, %c0_i32_0, %c0_i32_1 : i32, i32, i32, i32
  }
  func.func @transform_4(%arg0: i32, %arg1: i32) -> (i32, i32, i32) {
    %c0_i32 = arith.constant 0 : i32
    %c0_i32_0 = arith.constant 0 : i32
    %c0_i32_1 = arith.constant 0 : i32
    return %arg1, %c0_i32, %c0_i32_0 : i32, i32, i32
  }
  func.func @transform_5(%arg0: i32, %arg1: i32) -> (i32, i32, i32) {
    %c0_i32 = arith.constant 0 : i32
    %c0_i32_0 = arith.constant 0 : i32
    %c0_i32_1 = arith.constant 0 : i32
    return %arg0, %c0_i32, %c0_i32_0 : i32, i32, i32
  }
}

</mosaic_0001>

<llo_original>
// kernel: tpu_custom_call.1
$region0: #{tpu_custom_call.1}
  #allocation0 [shape = 'u32[]', space=smem, size = 0x4, offset = 0x4, fixed_abs, tag = 'smem constant byte address 0x4 - core index']
  #allocation1 [shape = 'u32[144,128]{1,0:T(1,128)}', space=vmem, size = 0x12000, scoped, tag = 'internal scratch']
  %s0 = inlined_call_operand.hbm [shape: f32[4,16,32], index: 0, kind: input, shape index: {}]
  %s1 = inlined_call_operand.vmem [shape: f32[3,4,1,32], index: 1, kind: input, shape index: {}]
  %s2 = inlined_call_operand.vmem [shape: f32[4,1,16], index: 2, kind: input, shape index: {}]
  %s3 = inlined_call_operand.hbm [shape: f32[3,2,32,32], index: 3, kind: input, shape index: {}]
  %s4 = inlined_call_operand.vmem [shape: f32[3,5,32], index: 4, kind: input, shape index: {}]
  %s5 = inlined_call_operand.hbm [shape: f32[4,16,32], index: 5, kind: output, shape index: {}]
  %s6 = sld [smem:[#allocation0]]
  $region65: #{tpu_custom_call.1} parent=0
    _
  %s8 = ssub.s32 1, %s6
  %s9 = scalar_select 0, %s8, %s6
  $region1: #{tpu_custom_call.1} parent=0
    #allocation2 [shape = 'u8[32768]{0}', space=vmem, size = 0x8000, scoped, tag = 'input window, operand 0, single buffered']
    #allocation3 [shape = 's32[2]{0}', space=sflag, size = 0x8, scoped, tag = 'scoped memory for tpu_custom_call.1']
    #allocation4 [shape = 's32[2]{0}', space=sflag, size = 0x8, scoped, tag = 'scoped memory for tpu_custom_call.1']
    #allocation5 [shape = 'u8[65536]{0}', space=vmem, size = 0x10000, scoped, tag = 'input window, operand 3']
    #allocation6 [shape = 's32[2]{0}', space=sflag, size = 0x8, scoped, tag = 'scoped memory for tpu_custom_call.1']
    #allocation7 [shape = 'u8[32768]{0}', space=vmem, size = 0x8000, scoped, tag = 'output window, operand 0, single buffered']
    %10 = vsyncpa [#allocation3], 0
    %11 = vsyncpa [#allocation6], 0
    %s12 = scalar_lea.sflag [#allocation6], 1
    %13 = vsyncpa %s12, 0
    %14 = vsyncpa [#allocation4], 0
    loop: start=0, step=1, limit=5
    $region2: #{tpu_custom_call.1} parent=1 // loop_pre_header
      _
    $region3: #{tpu_custom_call.1} parent=1 // loop_header
      %s16 = sphi 0, %s20
      %p17 = scmp.ge.s32.totalorder %s16, 5
      %s23 = sphi 0, %s35
      %s24 = sphi 0, %s31
      %s25 = sphi 0, %s23
      %s26 = sphi 0, %s24
      %s27 = sphi 0, %s25
      %s28 = sphi 0, %s26
      %s38 = sphi 0, %s40
      %s41 = sphi 0, %s38
      %s42 = sphi 0, %s41
      %s58 = sphi 0, %s42
      %s66 = sphi 0, %s68
      %s69 = sphi 0, %s66
      %s70 = sphi 0, %s69
      %s86 = sphi 0, %s70
      %s92 = sphi 0, %s94
      %s95 = sphi 0, %s92
      %s96 = sphi 0, %s95
      %s112 = sphi 0, %s96
      %s118 = sphi 0, %s120
      %s121 = sphi 0, %s118
      %s122 = sphi 0, %s121
      %s138 = sphi 0, %s122
      %s144 = sphi 0, %s146
      %s147 = sphi 0, %s144
      %s148 = sphi 0, %s147
      %s164 = sphi 0, %s148
      %s170 = sphi 0, %s172
      %s173 = sphi 0, %s170
      %s174 = sphi 0, %s173
      %s190 = sphi 0, %s174
    $region4: #{tpu_custom_call.1} parent=1 // loop_header_branch
      %19 = sbr.rel (%p17) target = $region8
    $region5: #{tpu_custom_call.1} parent=1 // loop_body
      %s21 = ssub.s32 %s16, 1
      %s22 = ssub.s32 %s16, 2
      %s29 = sadd.s32 1, %s24
      %p30 = scmp.ge.s32.totalorder %s29, 3
      %s31 = scalar_select %p30, 0, %s29
      %s32 = sadd.s32 1, %s23
      %s33 = scalar_select %p30, %s32, %s23
      %p34 = scmp.ge.s32.totalorder %s33, 1
      %s35 = scalar_select %p34, 0, %s33
      %s36 = ssub.s32 %s23, %s35
      %p37 = scmp.eq.s32.totalorder %s36, 0
      %s39 = sadd.s32 %s38, 1
      %s40 = scalar_select %p37, %s38, %s39
      %p43 = pneg %p37
      %p44 = scmp.eq.s32.totalorder %s16, 2
      %p45 = por %p43, %p44
      %p46 = scmp.ne.s32.totalorder %s38, %s41
      %p47 = scmp.eq.s32.totalorder %s16, 0
      %p48 = por %p46, %p47
      %p49 = scmp.ne.s32.totalorder %s38, %s41
      %p50 = scmp.eq.s32.totalorder %s21, 2
      %p51 = por %p49, %p50
      %p52 = scmp.ne.s32.totalorder %s41, %s42
      %p53 = scmp.eq.s32.totalorder %s21, 0
      %p54 = por %p52, %p53
      %p55 = scmp.ne.s32.totalorder %s41, %s42
      %p56 = scmp.eq.s32.totalorder %s22, 2
      %p57 = por %p55, %p56
      %p59 = scmp.ne.s32.totalorder %s42, %s58
      %p60 = scmp.eq.s32.totalorder %s22, 0
      %p61 = por %p59, %p60
      %s62 = ssub.s32 %s24, %s31
      %s63 = ssub.s32 %s23, %s35
      %s64 = sor.u32 %s62, %s63
      %p65 = scmp.eq.s32.totalorder %s64, 0
      %s67 = sadd.s32 %s66, 1
      %s68 = scalar_select %p65, %s66, %s67
      %p71 = pneg %p65
      %p72 = scmp.eq.s32.totalorder %s16, 2
      %p73 = por %p71, %p72
      %p74 = scmp.ne.s32.totalorder %s66, %s69
      %p75 = scmp.eq.s32.totalorder %s16, 0
      %p76 = por %p74, %p75
      %p77 = scmp.ne.s32.totalorder %s66, %s69
      %p78 = scmp.eq.s32.totalorder %s21, 2
      %p79 = por %p77, %p78
      %p80 = scmp.ne.s32.totalorder %s69, %s70
      %p81 = scmp.eq.s32.totalorder %s21, 0
      %p82 = por %p80, %p81
      %p83 = scmp.ne.s32.totalorder %s69, %s70
      %p84 = scmp.eq.s32.totalorder %s22, 2
      %p85 = por %p83, %p84
      %p87 = scmp.ne.s32.totalorder %s70, %s86
      %p88 = scmp.eq.s32.totalorder %s22, 0
      %p89 = por %p87, %p88
      %s90 = ssub.s32 %s23, %s35
      %p91 = scmp.eq.s32.totalorder %s90, 0
      %s93 = sadd.s32 %s92, 1
      %s94 = scalar_select %p91, %s92, %s93
      %p97 = pneg %p91
      %p98 = scmp.eq.s32.totalorder %s16, 2
      %p99 = por %p97, %p98
      %p100 = scmp.ne.s32.totalorder %s92, %s95
      %p101 = scmp.eq.s32.totalorder %s16, 0
      %p102 = por %p100, %p101
      %p103 = scmp.ne.s32.totalorder %s92, %s95
      %p104 = scmp.eq.s32.totalorder %s21, 2
      %p105 = por %p103, %p104
      %p106 = scmp.ne.s32.totalorder %s95, %s96
      %p107 = scmp.eq.s32.totalorder %s21, 0
      %p108 = por %p106, %p107
      %p109 = scmp.ne.s32.totalorder %s95, %s96
      %p110 = scmp.eq.s32.totalorder %s22, 2
      %p111 = por %p109, %p110
      %p113 = scmp.ne.s32.totalorder %s96, %s112
      %p114 = scmp.eq.s32.totalorder %s22, 0
      %p115 = por %p113, %p114
      %s116 = ssub.s32 %s24, %s31
      %p117 = scmp.eq.s32.totalorder %s116, 0
      %s119 = sadd.s32 %s118, 1
      %s120 = scalar_select %p117, %s118, %s119
      %p123 = pneg %p117
      %p124 = scmp.eq.s32.totalorder %s16, 2
      %p125 = por %p123, %p124
      %p126 = scmp.ne.s32.totalorder %s118, %s121
      %p127 = scmp.eq.s32.totalorder %s16, 0
      %p128 = por %p126, %p127
      %p129 = scmp.ne.s32.totalorder %s118, %s121
      %p130 = scmp.eq.s32.totalorder %s21, 2
      %p131 = por %p129, %p130
      %p132 = scmp.ne.s32.totalorder %s121, %s122
      %p133 = scmp.eq.s32.totalorder %s21, 0
      %p134 = por %p132, %p133
      %p135 = scmp.ne.s32.totalorder %s121, %s122
      %p136 = scmp.eq.s32.totalorder %s22, 2
      %p137 = por %p135, %p136
      %p139 = scmp.ne.s32.totalorder %s122, %s138
      %p140 = scmp.eq.s32.totalorder %s22, 0
      %p141 = por %p139, %p140
      %s142 = ssub.s32 %s24, %s31
      %p143 = scmp.eq.s32.totalorder %s142, 0
      %s145 = sadd.s32 %s144, 1
      %s146 = scalar_select %p143, %s144, %s145
      %p149 = pneg %p143
      %p150 = scmp.eq.s32.totalorder %s16, 2
      %p151 = por %p149, %p150
      %p152 = scmp.ne.s32.totalorder %s144, %s147
      %p153 = scmp.eq.s32.totalorder %s16, 0
      %p154 = por %p152, %p153
      %p155 = scmp.ne.s32.totalorder %s144, %s147
      %p156 = scmp.eq.s32.totalorder %s21, 2
      %p157 = por %p155, %p156
      %p158 = scmp.ne.s32.totalorder %s147, %s148
      %p159 = scmp.eq.s32.totalorder %s21, 0
      %p160 = por %p158, %p159
      %p161 = scmp.ne.s32.totalorder %s147, %s148
      %p162 = scmp.eq.s32.totalorder %s22, 2
      %p163 = por %p161, %p162
      %p165 = scmp.ne.s32.totalorder %s148, %s164
      %p166 = scmp.eq.s32.totalorder %s22, 0
      %p167 = por %p165, %p166
      %s168 = ssub.s32 %s23, %s35
      %p169 = scmp.eq.s32.totalorder %s168, 0
      %s171 = sadd.s32 %s170, 1
      %s172 = scalar_select %p169, %s170, %s171
      %p175 = pneg %p169
      %p176 = scmp.eq.s32.totalorder %s16, 2
      %p177 = por %p175, %p176
      %p178 = scmp.ne.s32.totalorder %s170, %s173
      %p179 = scmp.eq.s32.totalorder %s16, 0
      %p180 = por %p178, %p179
      %p181 = scmp.ne.s32.totalorder %s170, %s173
      %p182 = scmp.eq.s32.totalorder %s21, 2
      %p183 = por %p181, %p182
      %p184 = scmp.ne.s32.totalorder %s173, %s174
      %p185 = scmp.eq.s32.totalorder %s21, 0
      %p186 = por %p184, %p185
      %p187 = scmp.ne.s32.totalorder %s173, %s174
      %p188 = scmp.eq.s32.totalorder %s22, 2
      %p189 = por %p187, %p188
      %p191 = scmp.ne.s32.totalorder %s174, %s190
      %p192 = scmp.eq.s32.totalorder %s22, 0
      %p193 = por %p191, %p192
      %p194 = scmp.le.s32.totalorder 1, %s16
      %p195 = scmp.lt.s32.totalorder %s16, 4
      %p196 = pnand %p194, %p195
      %p197 = pneg %p196
      // Predicated region
      $region9: #{tpu_custom_call.1} parent=5 // pred_check
        _
      $region10: #{tpu_custom_call.1} parent=5 // pred_check_branch
        %199 = sbr.rel (%p196) target = $region12
      $region11: #{tpu_custom_call.1} parent=5 // pred_region
        %s200 = ssub.s32 %s16, 1
        // Predicated region
        $region13: #{tpu_custom_call.1} parent=11 // pred_check
          %p201 = pneg %p54
        $region14: #{tpu_custom_call.1} parent=11 // pred_check_branch
          %203 = sbr.rel (%p201) target = $region16
        $region15: #{tpu_custom_call.1} parent=11 // pred_region
          %s204 = smul.u32 4, %s25
          %s206 = ssub.s32 1024, 1024
          %207 = vsyncadd [#allocation3], %s206
          %s208 = smul.addr %s204, 2
          %s209 = smul.addr %s208, 128
          %s210 = scalar_lea.hbm %s0, %s209
          %s211 = sshll.u32 [#allocation2], 4
          %s212 = int_to_ptr.vmem [resolvable:$true] %s211
          %217 = dma.hbm_to_vmem [thread:$0]  %s210, 1024, %s212, [#allocation3], 128, 128, 8
        $region16: #{tpu_custom_call.1} parent=11 // pred_fallthru
          _
        // Predicated region
        $region17: #{tpu_custom_call.1} parent=11 // pred_check
          %p218 = pneg %p108
        $region18: #{tpu_custom_call.1} parent=11 // pred_check_branch
          %220 = sbr.rel (%p218) target = $region20
        $region19: #{tpu_custom_call.1} parent=11 // pred_region
          %s221 = smul.u32 4, %s25
          %p222 = scmp.lt.s32.totalorder %s221, 3
          %s223 = scalar_select %p222, %s221, 3
          %s224 = scalar_lea.vmem %s2, %s223
          %s225 = smul.u32 4, %s25
        $region20: #{tpu_custom_call.1} parent=11 // pred_fallthru
          _
      $region12: #{tpu_custom_call.1} parent=5 // pred_fallthru
        _
      %p226 = scmp.lt.s32.totalorder %s16, 3
      // Predicated region
      $region21: #{tpu_custom_call.1} parent=5 // pred_check
        %p227 = pneg %p226
      $region22: #{tpu_custom_call.1} parent=5 // pred_check_branch
        %229 = sbr.rel (%p227) target = $region24
      $region23: #{tpu_custom_call.1} parent=5 // pred_region
        // Predicated region
        $region25: #{tpu_custom_call.1} parent=23 // pred_check
          %p230 = pneg %p76
        $region26: #{tpu_custom_call.1} parent=23 // pred_check_branch
          %232 = sbr.rel (%p230) target = $region28
        $region27: #{tpu_custom_call.1} parent=23 // pred_region
          %s233 = smul.u32 4, %s23
          %p234 = scmp.lt.s32.totalorder %s24, 2
          %s235 = scalar_select %p234, %s24, 2
          %p236 = scmp.lt.s32.totalorder %s233, 3
          %s237 = scalar_select %p236, %s233, 3
          %s238 = smul.addr %s235, 4
          %s239 = sadd.s32 %s237, %s238
          %s240 = scalar_lea.vmem %s1, %s239
          %s241 = smul.u32 4, %s23
        $region28: #{tpu_custom_call.1} parent=23 // pred_fallthru
          _
        // Predicated region
        $region29: #{tpu_custom_call.1} parent=23 // pred_check
          %p242 = pneg %p128
        $region30: #{tpu_custom_call.1} parent=23 // pred_check_branch
          %244 = sbr.rel (%p242) target = $region32
        $region31: #{tpu_custom_call.1} parent=23 // pred_region
          %s245 = sand.u32 %s118, 1
          %s246 = scalar_lea.sflag [#allocation6], %s245
          %s247 = sand.u32 %s118, 1
          %s248 = smul.addr %s247, 64
          %s249 = scalar_lea.vmem [#allocation5], %s248
          %s251 = ssub.s32 1024, 1024
          %252 = vsyncadd %s246, %s251
          %s253 = smul.addr %s24, 8
          %s254 = smul.addr %s253, 128
          %s255 = scalar_lea.hbm %s3, %s254
          %s256 = sshll.u32 %s249, 4
          %s257 = int_to_ptr.vmem [resolvable:$true] %s256
          %262 = dma.hbm_to_vmem [thread:$0]  %s255, 1024, %s257, %s246, 128, 128, 8
        $region32: #{tpu_custom_call.1} parent=23 // pred_fallthru
          _
        // Predicated region
        $region33: #{tpu_custom_call.1} parent=23 // pred_check
          %p263 = pneg %p154
        $region34: #{tpu_custom_call.1} parent=23 // pred_check_branch
          %265 = sbr.rel (%p263) target = $region36
        $region35: #{tpu_custom_call.1} parent=23 // pred_region
          %p266 = scmp.lt.s32.totalorder %s24, 2
          %s267 = scalar_select %p266, %s24, 2
          %s268 = smul.addr %s267, 8
          %s269 = scalar_lea.vmem %s4, %s268
        $region36: #{tpu_custom_call.1} parent=23 // pred_fallthru
          _
      $region24: #{tpu_custom_call.1} parent=5 // pred_fallthru
        _
      %p270 = scmp.le.s32.totalorder 1, %s16
      %p271 = scmp.lt.s32.totalorder %s16, 4
      %p272 = pnand %p270, %p271
      %p273 = pneg %p272
      // Predicated region
      $region37: #{tpu_custom_call.1} parent=5 // pred_check
        _
      $region38: #{tpu_custom_call.1} parent=5 // pred_check_branch
        %275 = sbr.rel (%p272) target = $region40
      $region39: #{tpu_custom_call.1} parent=5 // pred_region
        %s276 = ssub.s32 %s16, 1
        // Predicated region
        $region41: #{tpu_custom_call.1} parent=39 // pred_check
          %p277 = pneg %p54
        $region42: #{tpu_custom_call.1} parent=39 // pred_check_branch
          %279 = sbr.rel (%p277) target = $region44
        $region43: #{tpu_custom_call.1} parent=39 // pred_region
          %280 = dma.done [#allocation3], 1024
        $region44: #{tpu_custom_call.1} parent=39 // pred_fallthru
          _
        %s281 = sand.u32 %s121, 1
        %s282 = scalar_lea.sflag [#allocation6], %s281
        %s283 = sand.u32 %s121, 1
        %s284 = smul.addr %s283, 64
        %s285 = scalar_lea.vmem [#allocation5], %s284
        // Predicated region
        $region45: #{tpu_custom_call.1} parent=39 // pred_check
          %p286 = pneg %p134
        $region46: #{tpu_custom_call.1} parent=39 // pred_check_branch
          %288 = sbr.rel (%p286) target = $region48
        $region47: #{tpu_custom_call.1} parent=39 // pred_region
          %289 = dma.done %s282, 1024
        $region48: #{tpu_custom_call.1} parent=39 // pred_fallthru
          _
        %p290 = pneg %p54
        %p291 = pneg %p51
        %s292 = smul.u32 4, %s25
        %p293 = scmp.lt.s32.totalorder %s26, 2
        %s294 = scalar_select %p293, %s26, 2
        %p295 = scmp.lt.s32.totalorder %s292, 3
        %s296 = scalar_select %p295, %s292, 3
        %s297 = smul.addr %s294, 4
        %s298 = sadd.s32 %s296, %s297
        %s299 = scalar_lea.vmem %s1, %s298
        %p300 = pneg %p82
        %p301 = pneg %p79
        %s302 = smul.u32 4, %s25
        %p303 = scmp.lt.s32.totalorder %s302, 3
        %s304 = scalar_select %p303, %s302, 3
        %s305 = scalar_lea.vmem %s2, %s304
        %p306 = pneg %p108
        %p307 = pneg %p105
        %s308 = sand.u32 %s121, 1
        %s309 = scalar_lea.sflag [#allocation6], %s308
        %s310 = sand.u32 %s121, 1
        %s311 = smul.addr %s310, 64
        %s312 = scalar_lea.vmem [#allocation5], %s311
        %p313 = pneg %p134
        %p314 = pneg %p131
        %p315 = scmp.lt.s32.totalorder %s26, 2
        %s316 = scalar_select %p315, %s26, 2
        %s317 = smul.addr %s316, 8
        %s318 = scalar_lea.vmem %s4, %s317
        %p319 = pneg %p160
        %p320 = pneg %p157
        %p321 = pneg %p186
        %p322 = pneg %p183
        %s323 = smul.u32 4, %s25
        %s324 = smul.u32 4, %s25
        %p325 = scmp.lt.s32.totalorder %s26, 2
        %s326 = scalar_select %p325, %s26, 2
        %p327 = scmp.lt.s32.totalorder %s324, 3
        %s328 = scalar_select %p327, %s324, 3
        %s329 = smul.addr %s326, 4
        %s330 = sadd.s32 %s328, %s329
        %s331 = scalar_lea.vmem %s1, %s330
        %s332 = smul.u32 4, %s25
        %s333 = smul.u32 4, %s25
        %p334 = scmp.lt.s32.totalorder %s333, 3
        %s335 = scalar_select %p334, %s333, 3
        %s336 = scalar_lea.vmem %s2, %s335
        %s337 = smul.u32 4, %s25
        %p338 = scmp.lt.s32.totalorder %s26, 2
        %s339 = scalar_select %p338, %s26, 2
        %s340 = smul.addr %s339, 8
        %s341 = scalar_lea.vmem %s4, %s340
        %s342 = smul.u32 4, %s25
        %p343 = scmp.eq.s32.totalorder %s26, 0
        // Predicated region
        $region49: #{tpu_custom_call.1} parent=39 // pred_check
          %p344 = pneg %p343
        $region50: #{tpu_custom_call.1} parent=39 // pred_check_branch
          %346 = sbr.rel (%p344) target = $region52
        $region51: #{tpu_custom_call.1} parent=39 // pred_region
          %v347 = vld [vmem:[#allocation2] sm:$0xff]
          %v348 = vld [vmem:[#allocation2 + $0x8] sm:$0xff]
          %v349 = vld [vmem:[#allocation2 + $0x10] sm:$0xff]
          %v350 = vld [vmem:[#allocation2 + $0x18] sm:$0xff]
          %v351 = vld [vmem:[#allocation2 + $0x20] sm:$0xff]
          %v352 = vld [vmem:[#allocation2 + $0x28] sm:$0xff]
          %v353 = vld [vmem:[#allocation2 + $0x30] sm:$0xff]
          %v354 = vld [vmem:[#allocation2 + $0x38] sm:$0xff]
          %vm355 = vcmask 261120
          %356 = vst.msk [vmem:[#allocation7] sm:$0xff] %vm355, %v347
          %357 = vst.msk [vmem:[#allocation7 + $0x8] sm:$0xff] %vm355, %v348
          %358 = vst.msk [vmem:[#allocation7 + $0x10] sm:$0xff] %vm355, %v349
          %359 = vst.msk [vmem:[#allocation7 + $0x18] sm:$0xff] %vm355, %v350
          %360 = vst.msk [vmem:[#allocation7 + $0x20] sm:$0xff] %vm355, %v351
          %361 = vst.msk [vmem:[#allocation7 + $0x28] sm:$0xff] %vm355, %v352
          %362 = vst.msk [vmem:[#allocation7 + $0x30] sm:$0xff] %vm355, %v353
          %363 = vst.msk [vmem:[#allocation7 + $0x38] sm:$0xff] %vm355, %v354
        $region52: #{tpu_custom_call.1} parent=39 // pred_fallthru
          _
        %v364 = vld [vmem:[#allocation7] sm:$0xff]
        %v365 = vld [vmem:[#allocation7 + $0x8] sm:$0xff]
        %v366 = vld [vmem:[#allocation7 + $0x10] sm:$0xff]
        %v367 = vld [vmem:[#allocation7 + $0x18] sm:$0xff]
        %v368 = vld [vmem:[#allocation7 + $0x20] sm:$0xff]
        %v369 = vld [vmem:[#allocation7 + $0x28] sm:$0xff]
        %v370 = vld [vmem:[#allocation7 + $0x30] sm:$0xff]
        %v371 = vld [vmem:[#allocation7 + $0x38] sm:$0xff]
        %v372 = vld [vmem:[%s341] sm:$0x1f]
        %v373 = vld [vmem:[%s336] sm:$0x1]
        %v374 = vld [vmem:[%s336 + $0x1] sm:$0x1]
        %v375 = vld [vmem:[%s336 + $0x2] sm:$0x1]
        %v376 = vld [vmem:[%s336 + $0x3] sm:$0x1]
        %v377 = vld [vmem:[%s331] sm:$0x1]
        %v378 = vld [vmem:[%s331 + $0x1] sm:$0x1]
        %v379 = vld [vmem:[%s331 + $0x2] sm:$0x1]
        %v380 = vld [vmem:[%s331 + $0x3] sm:$0x1]
        %v381 = vlaneseq
        %v382 = vshrl.u32 %v381, 7
        %v383 = vsub.s32 0, %v382
        %v384 = vrot.slane %v372, %v383
        %v385 = vadd.f32 %v364, %v384
        %v386 = vadd.f32 %v365, %v384
        %v387 = vadd.f32 %v366, %v384
        %v388 = vadd.f32 %v367, %v384
        %v389 = vadd.f32 %v368, %v384
        %v390 = vadd.f32 %v369, %v384
        %v391 = vadd.f32 %v370, %v384
        %v392 = vadd.f32 %v371, %v384
        %v393 = vlaneseq
        %v394 = vshrl.u32 %v393, 7
        %v395 = vsub.s32 0, %v394
        %v396 = vrot.slane %v373, %v395
        %398 = vbcast.lane.b32.xlu0 %v396, 256
        %v399 = vpop.permute.xlu0 %398
        %s401 = sor.u32 256, 8
        %402 = vbcast.lane.b32.xlu0 %v396, %s401
        %v403 = vpop.permute.xlu0 %402
        %v404 = vlaneseq
        %v405 = vshrl.u32 %v404, 7
        %v406 = vsub.s32 0, %v405
        %v407 = vrot.slane %v374, %v406
        %409 = vbcast.lane.b32.xlu0 %v407, 256
        %v410 = vpop.permute.xlu0 %409
        %s412 = sor.u32 256, 8
        %413 = vbcast.lane.b32.xlu0 %v407, %s412
        %v414 = vpop.permute.xlu0 %413
        %v415 = vlaneseq
        %v416 = vshrl.u32 %v415, 7
        %v417 = vsub.s32 0, %v416
        %v418 = vrot.slane %v375, %v417
        %420 = vbcast.lane.b32.xlu0 %v418, 256
        %v421 = vpop.permute.xlu0 %420
        %s423 = sor.u32 256, 8
        %424 = vbcast.lane.b32.xlu0 %v418, %s423
        %v425 = vpop.permute.xlu0 %424
        %v426 = vlaneseq
        %v427 = vshrl.u32 %v426, 7
        %v428 = vsub.s32 0, %v427
        %v429 = vrot.slane %v376, %v428
        %431 = vbcast.lane.b32.xlu0 %v429, 256
        %v432 = vpop.permute.xlu0 %431
        %s434 = sor.u32 256, 8
        %435 = vbcast.lane.b32.xlu0 %v429, %s434
        %v436 = vpop.permute.xlu0 %435
        %v441 = vlaneseq
        %v442 = vshrl.u32 %v441, 7
        %v443 = vsub.s32 0, %v442
        %v444 = vrot.slane %v377, %v443
        %v445 = vlaneseq
        %v446 = vshrl.u32 %v445, 7
        %v447 = vsub.s32 0, %v446
        %v448 = vrot.slane %v378, %v447
        %v449 = vlaneseq
        %v450 = vshrl.u32 %v449, 7
        %v451 = vsub.s32 0, %v450
        %v452 = vrot.slane %v379, %v451
        %v453 = vlaneseq
        %v454 = vshrl.u32 %v453, 7
        %v455 = vsub.s32 0, %v454
        %v456 = vrot.slane %v380, %v455
        %v461 = vmul.f32 %v399, %v444
        %v462 = vmul.f32 %v403, %v444
        %v463 = vmul.f32 %v410, %v448
        %v464 = vmul.f32 %v414, %v448
        %v465 = vmul.f32 %v421, %v452
        %v466 = vmul.f32 %v425, %v452
        %v467 = vmul.f32 %v432, %v456
        %v468 = vmul.f32 %v436, %v456
        %v469 = vadd.f32 %v385, %v461
        %v470 = vadd.f32 %v386, %v462
        %v471 = vadd.f32 %v387, %v463
        %v472 = vadd.f32 %v388, %v464
        %v473 = vadd.f32 %v389, %v465
        %v474 = vadd.f32 %v390, %v466
        %v475 = vadd.f32 %v391, %v467
        %v476 = vadd.f32 %v392, %v468
        %vm477 = vcmask 261120
        %v478 = vsel %vm477, %v469, 0.0
        %479 = vadd.xlane.f32.xlu0 %v478
        %v480 = vpop.xlane.xlu0 %479
        %v481 = vsel %vm477, %v470, 0.0
        %482 = vadd.xlane.f32.xlu0 %v481
        %v483 = vpop.xlane.xlu0 %482
        %v484 = vsel %vm477, %v471, 0.0
        %485 = vadd.xlane.f32.xlu0 %v484
        %v486 = vpop.xlane.xlu0 %485
        %v487 = vsel %vm477, %v472, 0.0
        %488 = vadd.xlane.f32.xlu0 %v487
        %v489 = vpop.xlane.xlu0 %488
        %v490 = vsel %vm477, %v473, 0.0
        %491 = vadd.xlane.f32.xlu0 %v490
        %v492 = vpop.xlane.xlu0 %491
        %v493 = vsel %vm477, %v474, 0.0
        %494 = vadd.xlane.f32.xlu0 %v493
        %v495 = vpop.xlane.xlu0 %494
        %v496 = vsel %vm477, %v475, 0.0
        %497 = vadd.xlane.f32.xlu0 %v496
        %v498 = vpop.xlane.xlu0 %497
        %v499 = vsel %vm477, %v476, 0.0
        %500 = vadd.xlane.f32.xlu0 %v499
        %v501 = vpop.xlane.xlu0 %500
        %v502 = vmul.f32 %v469, %v469
        %v503 = vmul.f32 %v470, %v470
        %v504 = vmul.f32 %v471, %v471
        %v505 = vmul.f32 %v472, %v472
        %v506 = vmul.f32 %v473, %v473
        %v507 = vmul.f32 %v474, %v474
        %v508 = vmul.f32 %v475, %v475
        %v509 = vmul.f32 %v476, %v476
        %v510 = vsel %vm477, %v502, 0.0
        %511 = vadd.xlane.f32.xlu0 %v510
        %v512 = vpop.xlane.xlu0 %511
        %v513 = vsel %vm477, %v503, 0.0
        %514 = vadd.xlane.f32.xlu0 %v513
        %v515 = vpop.xlane.xlu0 %514
        %v516 = vsel %vm477, %v504, 0.0
        %517 = vadd.xlane.f32.xlu0 %v516
        %v518 = vpop.xlane.xlu0 %517
        %v519 = vsel %vm477, %v505, 0.0
        %520 = vadd.xlane.f32.xlu0 %v519
        %v521 = vpop.xlane.xlu0 %520
        %v522 = vsel %vm477, %v506, 0.0
        %523 = vadd.xlane.f32.xlu0 %v522
        %v524 = vpop.xlane.xlu0 %523
        %v525 = vsel %vm477, %v507, 0.0
        %526 = vadd.xlane.f32.xlu0 %v525
        %v527 = vpop.xlane.xlu0 %526
        %v528 = vsel %vm477, %v508, 0.0
        %529 = vadd.xlane.f32.xlu0 %v528
        %v530 = vpop.xlane.xlu0 %529
        %v531 = vsel %vm477, %v509, 0.0
        %532 = vadd.xlane.f32.xlu0 %v531
        %v533 = vpop.xlane.xlu0 %532
        %v534 = vmul.f32 %v480, 0.03125
        %v535 = vmul.f32 %v483, 0.03125
        %v536 = vmul.f32 %v486, 0.03125
        %v537 = vmul.f32 %v489, 0.03125
        %v538 = vmul.f32 %v492, 0.03125
        %v539 = vmul.f32 %v495, 0.03125
        %v540 = vmul.f32 %v498, 0.03125
        %v541 = vmul.f32 %v501, 0.03125
        %v542 = vmul.f32 %v512, 0.03125
        %v543 = vmul.f32 %v515, 0.03125
        %v544 = vmul.f32 %v518, 0.03125
        %v545 = vmul.f32 %v521, 0.03125
        %v546 = vmul.f32 %v524, 0.03125
        %v547 = vmul.f32 %v527, 0.03125
        %v548 = vmul.f32 %v530, 0.03125
        %v549 = vmul.f32 %v533, 0.03125
        %v550 = vmul.f32 %v534, %v534
        %v551 = vmul.f32 %v535, %v535
        %v552 = vmul.f32 %v536, %v536
        %v553 = vmul.f32 %v537, %v537
        %v554 = vmul.f32 %v538, %v538
        %v555 = vmul.f32 %v539, %v539
        %v556 = vmul.f32 %v540, %v540
        %v557 = vmul.f32 %v541, %v541
        %v558 = vsub.f32 %v542, %v550
        %v559 = vsub.f32 %v543, %v551
        %v560 = vsub.f32 %v544, %v552
        %v561 = vsub.f32 %v545, %v553
        %v562 = vsub.f32 %v546, %v554
        %v563 = vsub.f32 %v547, %v555
        %v564 = vsub.f32 %v548, %v556
        %v565 = vsub.f32 %v549, %v557
        %v566 = vsub.f32 %v469, %v534
        %v567 = vsub.f32 %v470, %v535
        %v568 = vsub.f32 %v471, %v536
        %v569 = vsub.f32 %v472, %v537
        %v570 = vsub.f32 %v473, %v538
        %v571 = vsub.f32 %v474, %v539
        %v572 = vsub.f32 %v475, %v540
        %v573 = vsub.f32 %v476, %v541
        %v574 = vadd.f32 %v558, 1e-05
        %v575 = vadd.f32 %v559, 1e-05
        %v576 = vadd.f32 %v560, 1e-05
        %v577 = vadd.f32 %v561, 1e-05
        %v578 = vadd.f32 %v562, 1e-05
        %v579 = vadd.f32 %v563, 1e-05
        %v580 = vadd.f32 %v564, 1e-05
        %v581 = vadd.f32 %v565, 1e-05
        %v582 = vrsqrt.pop %v574
        %v583 = vrsqrt.pop %v575
        %v584 = vrsqrt.pop %v576
        %v585 = vrsqrt.pop %v577
        %v586 = vrsqrt.pop %v578
        %v587 = vrsqrt.pop %v579
        %v588 = vrsqrt.pop %v580
        %v589 = vrsqrt.pop %v581
        %v590 = vmul.f32 %v566, %v582
        %v591 = vmul.f32 %v567, %v583
        %v592 = vmul.f32 %v568, %v584
        %v593 = vmul.f32 %v569, %v585
        %v594 = vmul.f32 %v570, %v586
        %v595 = vmul.f32 %v571, %v587
        %v596 = vmul.f32 %v572, %v588
        %v597 = vmul.f32 %v573, %v589
        %v598 = vlaneseq
        %v599 = vshrl.u32 %v598, 7
        %v600 = vsub.s32 3, %v599
        %v601 = vrot.slane %v372, %v600
        %v602 = vmul.f32 %v590, %v601
        %v603 = vmul.f32 %v591, %v601
        %v604 = vmul.f32 %v592, %v601
        %v605 = vmul.f32 %v593, %v601
        %v606 = vmul.f32 %v594, %v601
        %v607 = vmul.f32 %v595, %v601
        %v608 = vmul.f32 %v596, %v601
        %v609 = vmul.f32 %v597, %v601
        %v610 = vlaneseq
        %v611 = vshrl.u32 %v610, 7
        %v612 = vsub.s32 4, %v611
        %v613 = vrot.slane %v372, %v612
        %v614 = vadd.f32 %v602, %v613
        %v615 = vadd.f32 %v603, %v613
        %v616 = vadd.f32 %v604, %v613
        %v617 = vadd.f32 %v605, %v613
        %v618 = vadd.f32 %v606, %v613
        %v619 = vadd.f32 %v607, %v613
        %v620 = vadd.f32 %v608, %v613
        %v621 = vadd.f32 %v609, %v613
        %v622 = vld [vmem:[%s285] sm:$0xff]
        %v623 = vld [vmem:[%s285 + $0x8] sm:$0xff]
        %v624 = vld [vmem:[%s285 + $0x10] sm:$0xff]
        %v625 = vld [vmem:[%s285 + $0x18] sm:$0xff]
        %v626 = vlaneseq
        %v627 = vshrl.u32 %v626, 7
        %v628 = vsub.s32 1, %v627
        %v629 = vrot.slane %v372, %v628
        %v631 = vsel %vm477, %v614, 0
        %v634 = vsel %vm477, %v615, 0
        %v637 = vsel %vm477, %v616, 0
        %v640 = vsel %vm477, %v617, 0
        %v643 = vsel %vm477, %v618, 0
        %v646 = vsel %vm477, %v619, 0
        %v649 = vsel %vm477, %v620, 0
        %v652 = vsel %vm477, %v621, 0
        %654 = vmatprep.subr.mxu0 0.0
        %655 = vmatpush1.msra.mxu0 0.0
        %656 = vmatprep.subr.mxu0 0.0
        %657 = vmatpush1.msra.mxu0 0.0
        %658 = vmatprep.subr.mxu0 0.0
        %659 = vmatpush1.msra.mxu0 0.0
        %660 = vmatprep.subr.mxu0 0.0
        %661 = vmatpush1.msra.mxu0 0.0
        %662 = vmatprep.subr.mxu0 0.0
        %663 = vmatpush1.msra.mxu0 0.0
        %664 = vmatprep.subr.mxu0 0.0
        %665 = vmatpush1.msra.mxu0 0.0
        %666 = vmatprep.subr.mxu0 0.0
        %667 = vmatpush1.msra.mxu0 0.0
        %668 = vmatprep.subr.mxu0 0.0
        %669 = vmatpush1.msra.mxu0 0.0
        %670 = vmatprep.subr.mxu0 0.0
        %671 = vmatpush1.msra.mxu0 0.0
        %672 = vmatprep.subr.mxu0 0.0
        %673 = vmatpush1.msra.mxu0 0.0
        %674 = vmatprep.subr.mxu0 0.0
        %675 = vmatpush1.msra.mxu0 0.0
        %676 = vmatprep.subr.mxu0 0.0
        %677 = vmatpush1.msra.mxu0 0.0
        %678 = vmatprep.subr.mxu0 0.0
        %679 = vmatpush1.msra.mxu0 %v625
        %680 = vmatprep.subr.mxu0 0.0
        %681 = vmatpush1.msra.mxu0 %v624
        %682 = vmatprep.subr.mxu0 0.0
        %683 = vmatpush1.msra.mxu0 %v623
        %684 = vmatprep.subr.mxu0 0.0
        %685 = vmatpush1.msra.mxu0 %v622
        %686 = vmatprep.subr.mxu0 0.0
        %687 = vmatpush2.msra.mxu0 0.0
        %688 = vmatprep.subr.mxu0 0.0
        %689 = vmatpush2.msra.mxu0 0.0
        %690 = vmatprep.subr.mxu0 0.0
        %691 = vmatpush2.msra.mxu0 0.0
        %692 = vmatprep.subr.mxu0 0.0
        %693 = vmatpush2.msra.mxu0 0.0
        %694 = vmatprep.subr.mxu0 0.0
        %695 = vmatpush2.msra.mxu0 0.0
        %696 = vmatprep.subr.mxu0 0.0
        %697 = vmatpush2.msra.mxu0 0.0
        %698 = vmatprep.subr.mxu0 0.0
        %699 = vmatpush2.msra.mxu0 0.0
        %700 = vmatprep.subr.mxu0 0.0
        %701 = vmatpush2.msra.mxu0 0.0
        %702 = vmatprep.subr.mxu0 0.0
        %703 = vmatpush2.msra.mxu0 0.0
        %704 = vmatprep.subr.mxu0 0.0
        %705 = vmatpush2.msra.mxu0 0.0
        %706 = vmatprep.subr.mxu0 0.0
        %707 = vmatpush2.msra.mxu0 0.0
        %708 = vmatprep.subr.mxu0 0.0
        %709 = vmatpush2.msra.mxu0 0.0
        %710 = vmatprep.subr.mxu0 0.0
        %711 = vmatpush2.msra.mxu0 0.0
        %712 = vmatprep.subr.mxu0 0.0
        %713 = vmatpush2.msra.mxu0 0.0
        %714 = vmatprep.subr.mxu0 0.0
        %715 = vmatpush2.msra.mxu0 0.0
        %716 = vmatprep.subr.mxu0 0.0
        %717 = vmatpush2.msra.mxu0 0.0
        %718 = vmatprep.mubr.f32.mxu0 0.0
        %719 = vmatmul.mubr.f32.gmra.mxu0 %v631
        %v720 = vpop.f32.mrf.mxu0
        %v721 = vadd.f32 %v629, %v720
        %v722 = vpop.f32.mrf.mxu0
        %723 = vmatprep.mubr.f32.mxu0 0.0
        %724 = vmatmul.mubr.f32.gmra.mxu0 %v634
        %v725 = vpop.f32.mrf.mxu0
        %v726 = vadd.f32 %v629, %v725
        %v727 = vpop.f32.mrf.mxu0
        %728 = vmatprep.mubr.f32.mxu0 0.0
        %729 = vmatmul.mubr.f32.gmra.mxu0 %v637
        %v730 = vpop.f32.mrf.mxu0
        %v731 = vadd.f32 %v629, %v730
        %v732 = vpop.f32.mrf.mxu0
        %733 = vmatprep.mubr.f32.mxu0 0.0
        %734 = vmatmul.mubr.f32.gmra.mxu0 %v640
        %v735 = vpop.f32.mrf.mxu0
        %v736 = vadd.f32 %v629, %v735
        %v737 = vpop.f32.mrf.mxu0
        %738 = vmatprep.mubr.f32.mxu0 0.0
        %739 = vmatmul.mubr.f32.gmra.mxu0 %v643
        %v740 = vpop.f32.mrf.mxu0
        %v741 = vadd.f32 %v629, %v740
        %v742 = vpop.f32.mrf.mxu0
        %743 = vmatprep.mubr.f32.mxu0 0.0
        %744 = vmatmul.mubr.f32.gmra.mxu0 %v646
        %v745 = vpop.f32.mrf.mxu0
        %v746 = vadd.f32 %v629, %v745
        %v747 = vpop.f32.mrf.mxu0
        %748 = vmatprep.mubr.f32.mxu0 0.0
        %749 = vmatmul.mubr.f32.gmra.mxu0 %v649
        %v750 = vpop.f32.mrf.mxu0
        %v751 = vadd.f32 %v629, %v750
        %v752 = vpop.f32.mrf.mxu0
        %753 = vmatprep.mubr.f32.mxu0 0.0
        %754 = vmatmul.mubr.f32.gmra.mxu0 %v652
        %v755 = vpop.f32.mrf.mxu0
        %v756 = vadd.f32 %v629, %v755
        %v757 = vpop.f32.mrf.mxu0
        %758 = vdwg.mxu0
        %v759 = vmax.f32 %v721, 0.0
        %v760 = vmax.f32 %v726, 0.0
        %v761 = vmax.f32 %v731, 0.0
        %v762 = vmax.f32 %v736, 0.0
        %v763 = vmax.f32 %v741, 0.0
        %v764 = vmax.f32 %v746, 0.0
        %v765 = vmax.f32 %v751, 0.0
        %v766 = vmax.f32 %v756, 0.0
        %s767 = scalar_lea.vmem %s285, 32 [#allocation5]
        %v768 = vld [vmem:[%s767] sm:$0xff]
        %v769 = vld [vmem:[%s767 + $0x8] sm:$0xff]
        %v770 = vld [vmem:[%s767 + $0x10] sm:$0xff]
        %v771 = vld [vmem:[%s767 + $0x18] sm:$0xff]
        %v772 = vlaneseq
        %v773 = vshrl.u32 %v772, 7
        %v774 = vsub.s32 2, %v773
        %v775 = vrot.slane %v372, %v774
        %v777 = vsel %vm477, %v759, 0
        %v780 = vsel %vm477, %v760, 0
        %v783 = vsel %vm477, %v761, 0
        %v786 = vsel %vm477, %v762, 0
        %v789 = vsel %vm477, %v763, 0
        %v792 = vsel %vm477, %v764, 0
        %v795 = vsel %vm477, %v765, 0
        %v798 = vsel %vm477, %v766, 0
        %800 = vmatprep.subr.mxu0 0.0
        %801 = vmatpush1.msra.mxu0 0.0
        %802 = vmatprep.subr.mxu0 0.0
        %803 = vmatpush1.msra.mxu0 0.0
        %804 = vmatprep.subr.mxu0 0.0
        %805 = vmatpush1.msra.mxu0 0.0
        %806 = vmatprep.subr.mxu0 0.0
        %807 = vmatpush1.msra.mxu0 0.0
        %808 = vmatprep.subr.mxu0 0.0
        %809 = vmatpush1.msra.mxu0 0.0
        %810 = vmatprep.subr.mxu0 0.0
        %811 = vmatpush1.msra.mxu0 0.0
        %812 = vmatprep.subr.mxu0 0.0
        %813 = vmatpush1.msra.mxu0 0.0
        %814 = vmatprep.subr.mxu0 0.0
        %815 = vmatpush1.msra.mxu0 0.0
        %816 = vmatprep.subr.mxu0 0.0
        %817 = vmatpush1.msra.mxu0 0.0
        %818 = vmatprep.subr.mxu0 0.0
        %819 = vmatpush1.msra.mxu0 0.0
        %820 = vmatprep.subr.mxu0 0.0
        %821 = vmatpush1.msra.mxu0 0.0
        %822 = vmatprep.subr.mxu0 0.0
        %823 = vmatpush1.msra.mxu0 0.0
        %824 = vmatprep.subr.mxu0 0.0
        %825 = vmatpush1.msra.mxu0 %v771
        %826 = vmatprep.subr.mxu0 0.0
        %827 = vmatpush1.msra.mxu0 %v770
        %828 = vmatprep.subr.mxu0 0.0
        %829 = vmatpush1.msra.mxu0 %v769
        %830 = vmatprep.subr.mxu0 0.0
        %831 = vmatpush1.msra.mxu0 %v768
        %832 = vmatprep.subr.mxu0 0.0
        %833 = vmatpush2.msra.mxu0 0.0
        %834 = vmatprep.subr.mxu0 0.0
        %835 = vmatpush2.msra.mxu0 0.0
        %836 = vmatprep.subr.mxu0 0.0
        %837 = vmatpush2.msra.mxu0 0.0
        %838 = vmatprep.subr.mxu0 0.0
        %839 = vmatpush2.msra.mxu0 0.0
        %840 = vmatprep.subr.mxu0 0.0
        %841 = vmatpush2.msra.mxu0 0.0
        %842 = vmatprep.subr.mxu0 0.0
        %843 = vmatpush2.msra.mxu0 0.0
        %844 = vmatprep.subr.mxu0 0.0
        %845 = vmatpush2.msra.mxu0 0.0
        %846 = vmatprep.subr.mxu0 0.0
        %847 = vmatpush2.msra.mxu0 0.0
        %848 = vmatprep.subr.mxu0 0.0
        %849 = vmatpush2.msra.mxu0 0.0
        %850 = vmatprep.subr.mxu0 0.0
        %851 = vmatpush2.msra.mxu0 0.0
        %852 = vmatprep.subr.mxu0 0.0
        %853 = vmatpush2.msra.mxu0 0.0
        %854 = vmatprep.subr.mxu0 0.0
        %855 = vmatpush2.msra.mxu0 0.0
        %856 = vmatprep.subr.mxu0 0.0
        %857 = vmatpush2.msra.mxu0 0.0
        %858 = vmatprep.subr.mxu0 0.0
        %859 = vmatpush2.msra.mxu0 0.0
        %860 = vmatprep.subr.mxu0 0.0
        %861 = vmatpush2.msra.mxu0 0.0
        %862 = vmatprep.subr.mxu0 0.0
        %863 = vmatpush2.msra.mxu0 0.0
        %864 = vmatprep.mubr.f32.mxu0 0.0
        %865 = vmatmul.mubr.f32.gmra.mxu0 %v777
        %v866 = vpop.f32.mrf.mxu0
        %v867 = vadd.f32 %v775, %v866
        %v868 = vpop.f32.mrf.mxu0
        %869 = vmatprep.mubr.f32.mxu0 0.0
        %870 = vmatmul.mubr.f32.gmra.mxu0 %v780
        %v871 = vpop.f32.mrf.mxu0
        %v872 = vadd.f32 %v775, %v871
        %v873 = vpop.f32.mrf.mxu0
        %874 = vmatprep.mubr.f32.mxu0 0.0
        %875 = vmatmul.mubr.f32.gmra.mxu0 %v783
        %v876 = vpop.f32.mrf.mxu0
        %v877 = vadd.f32 %v775, %v876
        %v878 = vpop.f32.mrf.mxu0
        %879 = vmatprep.mubr.f32.mxu0 0.0
        %880 = vmatmul.mubr.f32.gmra.mxu0 %v786
        %v881 = vpop.f32.mrf.mxu0
        %v882 = vadd.f32 %v775, %v881
        %v883 = vpop.f32.mrf.mxu0
        %884 = vmatprep.mubr.f32.mxu0 0.0
        %885 = vmatmul.mubr.f32.gmra.mxu0 %v789
        %v886 = vpop.f32.mrf.mxu0
        %v887 = vadd.f32 %v775, %v886
        %v888 = vpop.f32.mrf.mxu0
        %889 = vmatprep.mubr.f32.mxu0 0.0
        %890 = vmatmul.mubr.f32.gmra.mxu0 %v792
        %v891 = vpop.f32.mrf.mxu0
        %v892 = vadd.f32 %v775, %v891
        %v893 = vpop.f32.mrf.mxu0
        %894 = vmatprep.mubr.f32.mxu0 0.0
        %895 = vmatmul.mubr.f32.gmra.mxu0 %v795
        %v896 = vpop.f32.mrf.mxu0
        %v897 = vadd.f32 %v775, %v896
        %v898 = vpop.f32.mrf.mxu0
        %899 = vmatprep.mubr.f32.mxu0 0.0
        %900 = vmatmul.mubr.f32.gmra.mxu0 %v798
        %v901 = vpop.f32.mrf.mxu0
        %v902 = vadd.f32 %v775, %v901
        %v903 = vpop.f32.mrf.mxu0
        %904 = vdwg.mxu0
        %v905 = vadd.f32 %v469, %v867
        %v906 = vadd.f32 %v470, %v872
        %v907 = vadd.f32 %v471, %v877
        %v908 = vadd.f32 %v472, %v882
        %v909 = vadd.f32 %v473, %v887
        %v910 = vadd.f32 %v474, %v892
        %v911 = vadd.f32 %v475, %v897
        %v912 = vadd.f32 %v476, %v902
        %913 = vst.msk [vmem:[#allocation7] sm:$0xff] %vm477, %v905
        %914 = vst.msk [vmem:[#allocation7 + $0x8] sm:$0xff] %vm477, %v906
        %915 = vst.msk [vmem:[#allocation7 + $0x10] sm:$0xff] %vm477, %v907
        %916 = vst.msk [vmem:[#allocation7 + $0x18] sm:$0xff] %vm477, %v908
        %917 = vst.msk [vmem:[#allocation7 + $0x20] sm:$0xff] %vm477, %v909
        %918 = vst.msk [vmem:[#allocation7 + $0x28] sm:$0xff] %vm477, %v910
        %919 = vst.msk [vmem:[#allocation7 + $0x30] sm:$0xff] %vm477, %v911
        %920 = vst.msk [vmem:[#allocation7 + $0x38] sm:$0xff] %vm477, %v912
        // Predicated region
        $region53: #{tpu_custom_call.1} parent=39 // pred_check
          %p921 = pneg %p183
        $region54: #{tpu_custom_call.1} parent=39 // pred_check_branch
          %923 = sbr.rel (%p921) target = $region56
        $region55: #{tpu_custom_call.1} parent=39 // pred_region
          %s924 = smul.u32 4, %s25
          %s926 = ssub.s32 1024, 1024
          %927 = vsyncadd [#allocation4], %s926
          %s928 = smul.addr %s924, 2
          %s929 = smul.addr %s928, 128
          %s930 = scalar_lea.hbm %s5, %s929
          %s931 = sshll.u32 [#allocation7], 4
          %s932 = int_to_ptr.vmem [resolvable:$true] %s931
          %937 = dma.vmem_to_hbm [thread:$0]  %s932, 1024, %s930, [#allocation4], 128, 128, 8
        $region56: #{tpu_custom_call.1} parent=39 // pred_fallthru
          _
        // Predicated region
        $region57: #{tpu_custom_call.1} parent=39 // pred_check
          %p938 = pneg %p183
        $region58: #{tpu_custom_call.1} parent=39 // pred_check_branch
          %940 = sbr.rel (%p938) target = $region60
        $region59: #{tpu_custom_call.1} parent=39 // pred_region
          %941 = dma.done [#allocation4], 1024
        $region60: #{tpu_custom_call.1} parent=39 // pred_fallthru
          _
      $region40: #{tpu_custom_call.1} parent=5 // pred_fallthru
        _
      %p942 = scmp.le.s32.totalorder 2, %s16
      // Predicated region
      $region61: #{tpu_custom_call.1} parent=5 // pred_check
        %p943 = pneg %p942
      $region62: #{tpu_custom_call.1} parent=5 // pred_check_branch
        %945 = sbr.rel (%p943) target = $region64
      $region63: #{tpu_custom_call.1} parent=5 // pred_region
        %s946 = ssub.s32 %s16, 2
      $region64: #{tpu_custom_call.1} parent=5 // pred_fallthru
        _
    $region6: #{tpu_custom_call.1} parent=1 // loop_footer
      %s20 = sadd.s32 1, %s16
    $region7: #{tpu_custom_call.1} parent=1 // loop_footer_branch
      %15 = sbr.rel target = $region3
    $region8: #{tpu_custom_call.1} parent=1 // loop_exit
      _
    %947 = vsyncpa [#allocation3], 1
    %s948 = scalar_lea.sflag [#allocation3], 1
    %949 = vsyncpa %s948, 1
    %950 = vsyncpa [#allocation6], 1
    %s951 = scalar_lea.sflag [#allocation6], 1
    %952 = vsyncpa %s951, 1
    %953 = vsyncpa [#allocation4], 1
    %s954 = scalar_lea.sflag [#allocation4], 1
    %955 = vsyncpa %s954, 1

</llo_original>
